<compile_context>
chip_gen: v7x
topology: tpu7x:2x2x1
jax: 0.10.0
libtpu: 0.0.40
codegen_flags: <defaults>
</compile_context>

<pallas_src>
import jax
import jax.numpy as jnp
from jax.experimental import pallas as pl
from jax.experimental.pallas import tpu as pltpu


OUT_PAD = 128  # lane-dense output width (cols 0/1 carry q1/q2, rest are zero)


# ---------------------------------------------------------------------------
# Kernel: fused twin-head MLP  (3 matmuls + 2 ReLUs, one lane-dense store)
# ---------------------------------------------------------------------------
def _critic_matd3_fused_kernel(
    sa_ref,                       # [TB, D_in]
    w1_ref, b1_ref,               # [D_in, 2H], [1, 2H]
    w2_ref, b2_ref,               # [2H, 2H],   [1, 2H]
    w3_ref, b3_ref,               # [2H, OUT_PAD], [1, OUT_PAD]
    out_ref,                      # [TB, OUT_PAD]
):
    x = sa_ref[...].astype(jnp.float32)

    h = jnp.dot(x, w1_ref[...], preferred_element_type=jnp.float32) + b1_ref[...]
    h = jnp.maximum(h, 0.0)
    h = jnp.dot(h, w2_ref[...], preferred_element_type=jnp.float32) + b2_ref[...]
    h = jnp.maximum(h, 0.0)
    q = jnp.dot(h, w3_ref[...], preferred_element_type=jnp.float32) + b3_ref[...]

    out_ref[...] = q.astype(out_ref.dtype)


# ---------------------------------------------------------------------------
# Parameter packing: (w1..w6, b1..b6) -> fused twin-head matrices
# ---------------------------------------------------------------------------
def pack_params(p):
    H = p["w1"].shape[1]
    f32 = jnp.float32

    w1p = jnp.concatenate([p["w1"], p["w4"]], axis=1)          # [D_in, 2H]
    b1p = jnp.concatenate([p["b1"], p["b4"]], axis=1)          # [1, 2H]

    z = jnp.zeros((H, H), f32)
    w2p = jnp.concatenate(
        [jnp.concatenate([p["w2"], z], axis=1),
         jnp.concatenate([z, p["w5"]], axis=1)], axis=0)        # [2H, 2H] block-diag
    b2p = jnp.concatenate([p["b2"], p["b5"]], axis=1)           # [1, 2H]

    w3p = jnp.zeros((2 * H, OUT_PAD), f32)
    w3p = w3p.at[:H, 0:1].set(p["w3"]).at[H:, 1:2].set(p["w6"])  # [2H, OUT_PAD]
    b3p = jnp.zeros((1, OUT_PAD), f32)
    b3p = b3p.at[0, 0].set(p["b3"][0, 0]).at[0, 1].set(p["b6"][0, 0])

    return {"w1p": w1p, "b1p": b1p, "w2p": w2p, "b2p": b2p, "w3p": w3p, "b3p": b3p}


# ---------------------------------------------------------------------------
# Wrapper
# ---------------------------------------------------------------------------
def critic_matd3_forward(s_list, a_list, params, *, batch_tile=256):
    """Twin-Q forward pass. s_list / a_list are lists of [B, dim] arrays."""
    s = jnp.concatenate(s_list, axis=1)
    a = jnp.concatenate(a_list, axis=1)
    sa = jnp.concatenate([s, a], axis=1)                        # [B, D_in]

    pp = pack_params(params)

    B, D_in = sa.shape
    H2 = pp["w1p"].shape[1]                                     # 2 * hidden

    # Batch tiling: round tile to a sublane multiple; single grid step for
    # small B, otherwise 256-row tiles (zero-pad the batch to the tile grid).
    batch_tile = max(8, (batch_tile // 8) * 8)
    Bp = ((B + 7) // 8) * 8
    if Bp <= batch_tile:
        tile = Bp
    else:
        tile = batch_tile
        Bp = ((B + tile - 1) // tile) * tile
    if Bp != B:
        sa = jnp.pad(sa, ((0, Bp - B), (0, 0)))
    grid = (Bp // tile,)

    # VMEM budget: pipelined streams (double-buffered) + params (x2 buffers)
    # + f32 intermediates, with 2x margin, capped for v7x's 64 MiB VMEM.
    param_bytes = sum(int(v.size) * 4 for v in pp.values())
    stream_bytes = 2 * (tile * D_in * 4) + 2 * (tile * OUT_PAD * 4)
    interm_bytes = 2 * (tile * H2 * 4)
    vmem_limit = min(max(2 * (2 * param_bytes + stream_bytes + interm_bytes),
                         8 << 20), 48 << 20)

    def param_spec(shape):
        return pl.BlockSpec(shape, lambda i: (0, 0))

    in_specs = [
        pl.BlockSpec((tile, D_in), lambda i: (i, 0)),           # sa (batch-tiled)
        param_spec((D_in, H2)), param_spec((1, H2)),            # fused fc1|fc4
        param_spec((H2, H2)),   param_spec((1, H2)),            # fused fc2⊕fc5
        param_spec((H2, OUT_PAD)), param_spec((1, OUT_PAD)),    # fused fc3⊕fc6 (lane-padded)
    ]
    out_specs = pl.BlockSpec((tile, OUT_PAD), lambda i: (i, 0))
    out_shape = jax.ShapeDtypeStruct((Bp, OUT_PAD), jnp.float32)

    out = pl.pallas_call(
        _critic_matd3_fused_kernel,
        grid=grid,
        in_specs=in_specs,
        out_specs=out_specs,
        out_shape=out_shape,
        compiler_params=pltpu.CompilerParams(
            dimension_semantics=("parallel",),
            vmem_limit_bytes=int(vmem_limit),
        ),
    )(
        sa,
        pp["w1p"], pp["b1p"],
        pp["w2p"], pp["b2p"],
        pp["w3p"], pp["b3p"],
    )

    q = out[:B]
    return q[:, 0:1], q[:, 1:2]


# ---------------------------------------------------------------------------
# Deterministic parameter init (mirrors orthogonal_init: orthogonal weights,
# zero biases). Weights are stored [in, out] for the kernel's x @ W layout.
# ---------------------------------------------------------------------------
def _orthogonal(key, out_dim, in_dim, gain=1.0):
    rows, cols = out_dim, in_dim
    flat = jax.random.normal(key, (max(rows, cols), min(rows, cols)), jnp.float32)
    q, r = jnp.linalg.qr(flat)
    q = q * jnp.sign(jnp.diag(r))
    if rows < cols:
        q = q.T
    w_torch = gain * q[:rows, :cols]          # PyTorch layout [out, in]
    return w_torch.T                          # kernel layout  [in, out]


def init_params(key, d_in, hidden):
    keys = jax.random.split(key, 6)
    return {
        "w1": _orthogonal(keys[0], hidden, d_in), "b1": jnp.zeros((1, hidden), jnp.float32),
        "w2": _orthogonal(keys[1], hidden, hidden), "b2": jnp.zeros((1, hidden), jnp.float32),
        "w3": _orthogonal(keys[2], 1, hidden),      "b3": jnp.zeros((1, 1), jnp.float32),
        "w4": _orthogonal(keys[3], hidden, d_in),   "b4": jnp.zeros((1, hidden), jnp.float32),
        "w5": _orthogonal(keys[4], hidden, hidden), "b5": jnp.zeros((1, hidden), jnp.float32),
        "w6": _orthogonal(keys[5], 1, hidden),      "b6": jnp.zeros((1, 1), jnp.float32),
    }


# ---------------------------------------------------------------------------
# Reference (pure JAX, unfused) for a sanity check of the packed kernel
# ---------------------------------------------------------------------------
def reference_forward(s_list, a_list, p):
    sa = jnp.concatenate([jnp.concatenate(s_list, 1), jnp.concatenate(a_list, 1)], 1)
    h = jax.nn.relu(sa @ p["w1"] + p["b1"])
    h = jax.nn.relu(h @ p["w2"] + p["b2"])
    q1 = h @ p["w3"] + p["b3"]
    g = jax.nn.relu(sa @ p["w4"] + p["b4"])
    g = jax.nn.relu(g @ p["w5"] + p["b5"])
    q2 = g @ p["w6"] + p["b6"]
    return q1, q2


if __name__ == "__main__":
    # Small MPE-like setup: 3 agents, obs dims [6, 6, 6], action dims [2, 2, 2].
    obs_dim_n = [6, 6, 6]
    action_dim_n = [2, 2, 2]
    hidden_dim = 32
    batch = 16
    d_in = sum(obs_dim_n) + sum(action_dim_n)   # 24

    key = jax.random.PRNGKey(0)
    k_params, *k_inputs = jax.random.split(key, 1 + len(obs_dim_n) * 2)

    params = init_params(k_params, d_in, hidden_dim)

    s_list = [
        jax.random.normal(k_inputs[i], (batch, obs_dim_n[i]), jnp.float32)
        for i in range(len(obs_dim_n))
    ]
    a_list = [
        jax.random.normal(k_inputs[len(obs_dim_n) + i], (batch, action_dim_n[i]),
                          jnp.float32)
        for i in range(len(action_dim_n))
    ]

    q1, q2 = critic_matd3_forward(s_list, a_list, params)
    jax.block_until_ready((q1, q2))

    q1_ref, q2_ref = reference_forward(s_list, a_list, params)
    assert q1.shape == (batch, 1) and q2.shape == (batch, 1)
    assert jnp.allclose(q1, q1_ref, atol=1e-5, rtol=1e-5)
    assert jnp.allclose(q2, q2_ref, atol=1e-5, rtol=1e-5)

    # Also exercise a non-divisible, multi-tile batch path (padding + grid > 1).
    big_b = 300
    kb = jax.random.PRNGKey(1)
    ks = jax.random.split(kb, len(obs_dim_n) * 2)
    s_big = [jax.random.normal(ks[i], (big_b, obs_dim_n[i]), jnp.float32)
             for i in range(len(obs_dim_n))]
    a_big = [jax.random.normal(ks[len(obs_dim_n) + i], (big_b, action_dim_n[i]),
                               jnp.float32) for i in range(len(action_dim_n))]
    q1b, q2b = critic_matd3_forward(s_big, a_big, params, batch_tile=128)
    jax.block_until_ready((q1b, q2b))
    q1b_ref, q2b_ref = reference_forward(s_big, a_big, params)
    assert jnp.allclose(q1b, q1b_ref, atol=1e-5, rtol=1e-5)
    assert jnp.allclose(q2b, q2b_ref, atol=1e-5, rtol=1e-5)

    print("KERNEL_OK")
</pallas_src>

<mosaic_0001>
module attributes {stable_mosaic.version = 11 : i64} {
  func.func @_critic_matd3_fused_kernel(%arg0: i32, %arg1: memref<16x24xf32, #tpu.memory_space<vmem>>, %arg2: memref<24x64xf32, #tpu.memory_space<vmem>>, %arg3: memref<1x64xf32, #tpu.memory_space<vmem>>, %arg4: memref<64x64xf32, #tpu.memory_space<vmem>>, %arg5: memref<1x64xf32, #tpu.memory_space<vmem>>, %arg6: memref<64x128xf32, #tpu.memory_space<vmem>>, %arg7: memref<1x128xf32, #tpu.memory_space<vmem>>, %arg8: memref<16x128xf32, #tpu.memory_space<vmem>>) attributes {dimension_semantics = [#tpu.dimension_semantics<parallel>], iteration_bounds = array<i64: 1>, scalar_prefetch = 0 : i64, scratch_operands = 0 : i64, tpu.core_type = #tpu.core_type<tc>, window_params = [{transform_indices = @transform_0, window_bounds = array<i64: 16, 24>}, {pipeline_mode = #tpu.pipeline_mode<synchronous>, transform_indices = @transform_1, window_bounds = array<i64: 24, 64>}, {pipeline_mode = #tpu.pipeline_mode<synchronous>, transform_indices = @transform_2, window_bounds = array<i64: 1, 64>}, {pipeline_mode = #tpu.pipeline_mode<synchronous>, transform_indices = @transform_3, window_bounds = array<i64: 64, 64>}, {pipeline_mode = #tpu.pipeline_mode<synchronous>, transform_indices = @transform_4, window_bounds = array<i64: 1, 64>}, {pipeline_mode = #tpu.pipeline_mode<synchronous>, transform_indices = @transform_5, window_bounds = array<i64: 64, 128>}, {pipeline_mode = #tpu.pipeline_mode<synchronous>, transform_indices = @transform_6, window_bounds = array<i64: 1, 128>}, {transform_indices = @transform_7, window_bounds = array<i64: 16, 128>}]} {
    %c0 = arith.constant 0 : index
    %c0_0 = arith.constant 0 : index
    %0 = vector.load %arg1[%c0, %c0_0] : memref<16x24xf32, #tpu.memory_space<vmem>>, vector<16x24xf32>
    %c0_1 = arith.constant 0 : index
    %c0_2 = arith.constant 0 : index
    %1 = vector.load %arg2[%c0_1, %c0_2] : memref<24x64xf32, #tpu.memory_space<vmem>>, vector<24x64xf32>
    %cst = arith.constant dense<0.000000e+00> : vector<16x64xf32>
    %2 = tpu.matmul %0, %1, %cst {dimension_numbers = #tpu.dot_dimension_numbers<[1], [0], [0], [1], [0, 0, 1, 1], [], []>} : vector<16x24xf32>, vector<24x64xf32>, vector<16x64xf32> -> vector<16x64xf32>
    %c0_3 = arith.constant 0 : index
    %c0_4 = arith.constant 0 : index
    %3 = vector.load %arg3[%c0_3, %c0_4] : memref<1x64xf32, #tpu.memory_space<vmem>>, vector<1x64xf32>
    %4 = vector.broadcast %3 : vector<1x64xf32> to vector<16x64xf32>
    %5 = arith.addf %2, %4 : vector<16x64xf32>
    %cst_5 = arith.constant 0.000000e+00 : f32
    %6 = vector.broadcast %cst_5 : f32 to vector<16x64xf32>
    %7 = arith.maximumf %5, %6 : vector<16x64xf32>
    %c0_6 = arith.constant 0 : index
    %c0_7 = arith.constant 0 : index
    %8 = vector.load %arg4[%c0_6, %c0_7] : memref<64x64xf32, #tpu.memory_space<vmem>>, vector<64x64xf32>
    %cst_8 = arith.constant dense<0.000000e+00> : vector<16x64xf32>
    %9 = tpu.matmul %7, %8, %cst_8 {dimension_numbers = #tpu.dot_dimension_numbers<[1], [0], [0], [1], [0, 0, 1, 1], [], []>} : vector<16x64xf32>, vector<64x64xf32>, vector<16x64xf32> -> vector<16x64xf32>
    %c0_9 = arith.constant 0 : index
    %c0_10 = arith.constant 0 : index
    %10 = vector.load %arg5[%c0_9, %c0_10] : memref<1x64xf32, #tpu.memory_space<vmem>>, vector<1x64xf32>
    %11 = vector.broadcast %10 : vector<1x64xf32> to vector<16x64xf32>
    %12 = arith.addf %9, %11 : vector<16x64xf32>
    %cst_11 = arith.constant 0.000000e+00 : f32
    %13 = vector.broadcast %cst_11 : f32 to vector<16x64xf32>
    %14 = arith.maximumf %12, %13 : vector<16x64xf32>
    %c0_12 = arith.constant 0 : index
    %c0_13 = arith.constant 0 : index
    %15 = vector.load %arg6[%c0_12, %c0_13] : memref<64x128xf32, #tpu.memory_space<vmem>>, vector<64x128xf32>
    %cst_14 = arith.constant dense<0.000000e+00> : vector<16x128xf32>
    %16 = tpu.matmul %14, %15, %cst_14 {dimension_numbers = #tpu.dot_dimension_numbers<[1], [0], [0], [1], [0, 0, 1, 1], [], []>} : vector<16x64xf32>, vector<64x128xf32>, vector<16x128xf32> -> vector<16x128xf32>
    %c0_15 = arith.constant 0 : index
    %c0_16 = arith.constant 0 : index
    %17 = vector.load %arg7[%c0_15, %c0_16] : memref<1x128xf32, #tpu.memory_space<vmem>>, vector<1x128xf32>
    %18 = vector.broadcast %17 : vector<1x128xf32> to vector<16x128xf32>
    %19 = arith.addf %16, %18 : vector<16x128xf32>
    %c0_17 = arith.constant 0 : index
    %c0_18 = arith.constant 0 : index
    %20 = vector.load %arg8[%c0_17, %c0_18] : memref<16x128xf32, #tpu.memory_space<vmem>>, vector<16x128xf32>
    tpu.vector_store %arg8[%c0_17, %c0_18], %19 {strides = array<i32>} : memref<16x128xf32, #tpu.memory_space<vmem>>, vector<16x128xf32>,
    return
  }
  func.func @transform_0(%arg0: i32) -> (i32, i32) {
    %c0_i32 = arith.constant 0 : i32
    %c0_i32_0 = arith.constant 0 : i32
    return %arg0, %c0_i32 : i32, i32
  }
  func.func @transform_1(%arg0: i32) -> (i32, i32) {
    %c0_i32 = arith.constant 0 : i32
    %c0_i32_0 = arith.constant 0 : i32
    %c0_i32_1 = arith.constant 0 : i32
    return %c0_i32, %c0_i32_0 : i32, i32
  }
  func.func @transform_2(%arg0: i32) -> (i32, i32) {
    %c0_i32 = arith.constant 0 : i32
    %c0_i32_0 = arith.constant 0 : i32
    %c0_i32_1 = arith.constant 0 : i32
    return %c0_i32, %c0_i32_0 : i32, i32
  }
  func.func @transform_3(%arg0: i32) -> (i32, i32) {
    %c0_i32 = arith.constant 0 : i32
    %c0_i32_0 = arith.constant 0 : i32
    %c0_i32_1 = arith.constant 0 : i32
    return %c0_i32, %c0_i32_0 : i32, i32
  }
  func.func @transform_4(%arg0: i32) -> (i32, i32) {
    %c0_i32 = arith.constant 0 : i32
    %c0_i32_0 = arith.constant 0 : i32
    %c0_i32_1 = arith.constant 0 : i32
    return %c0_i32, %c0_i32_0 : i32, i32
  }
  func.func @transform_5(%arg0: i32) -> (i32, i32) {
    %c0_i32 = arith.constant 0 : i32
    %c0_i32_0 = arith.constant 0 : i32
    %c0_i32_1 = arith.constant 0 : i32
    return %c0_i32, %c0_i32_0 : i32, i32
  }
  func.func @transform_6(%arg0: i32) -> (i32, i32) {
    %c0_i32 = arith.constant 0 : i32
    %c0_i32_0 = arith.constant 0 : i32
    %c0_i32_1 = arith.constant 0 : i32
    return %c0_i32, %c0_i32_0 : i32, i32
  }
  func.func @transform_7(%arg0: i32) -> (i32, i32) {
    %c0_i32 = arith.constant 0 : i32
    %c0_i32_0 = arith.constant 0 : i32
    return %arg0, %c0_i32 : i32, i32
  }
}

</mosaic_0001>

<llo_original>
// kernel: tpu_custom_call.1
$region0: #{tpu_custom_call.1}
  #allocation0 [shape = 'u32[]', space=smem, size = 0x4, offset = 0x4, fixed_abs, tag = 'smem constant byte address 0x4 - core index']
  #allocation1 [shape = 'u32[144,128]{1,0:T(1,128)}', space=vmem, size = 0x12000, scoped, tag = 'internal scratch']
  %s0 = inlined_call_operand.hbm [shape: f32[16,24], index: 0, kind: input, shape index: {}]
  %s1 = inlined_call_operand.hbm [shape: f32[24,64], index: 1, kind: input, shape index: {}]
  %s2 = inlined_call_operand.vmem [shape: f32[1,64], index: 2, kind: input, shape index: {}]
  %s3 = inlined_call_operand.hbm [shape: f32[64,64], index: 3, kind: input, shape index: {}]
  %s4 = inlined_call_operand.vmem [shape: f32[1,64], index: 4, kind: input, shape index: {}]
  %s5 = inlined_call_operand.hbm [shape: f32[64,128], index: 5, kind: input, shape index: {}]
  %s6 = inlined_call_operand.vmem [shape: f32[1,128], index: 6, kind: input, shape index: {}]
  %s7 = inlined_call_operand.hbm [shape: f32[16,128], index: 7, kind: output, shape index: {}]
  %s8 = sld [smem:[#allocation0]]
  $region54: #{tpu_custom_call.1} parent=0
    _
  %s10 = ssub.s32 1, %s8
  %s11 = scalar_select 0, %s10, %s8
  $region1: #{tpu_custom_call.1} parent=0
    #allocation2 [shape = 'u8[8192]{0}', space=vmem, size = 0x2000, scoped, tag = 'input window, operand 0, single buffered']
    #allocation3 [shape = 's32[1]{0}', space=sflag, size = 0x4, scoped, tag = 'scoped memory for tpu_custom_call.1']
    #allocation4 [shape = 's32[1]{0}', space=sflag, size = 0x4, scoped, tag = 'scoped memory for tpu_custom_call.1']
    #allocation5 [shape = 'u8[12288]{0}', space=vmem, size = 0x3000, scoped, tag = 'input window, operand 1, single buffered']
    #allocation6 [shape = 's32[1]{0}', space=sflag, size = 0x4, scoped, tag = 'scoped memory for tpu_custom_call.1']
    #allocation7 [shape = 'u8[32768]{0}', space=vmem, size = 0x8000, scoped, tag = 'input window, operand 3, single buffered']
    #allocation8 [shape = 'u8[32768]{0}', space=vmem, size = 0x8000, scoped, tag = 'input window, operand 5, single buffered']
    #allocation9 [shape = 's32[1]{0}', space=sflag, size = 0x4, scoped, tag = 'scoped memory for tpu_custom_call.1']
    #allocation10 [shape = 'u8[8192]{0}', space=vmem, size = 0x2000, scoped, tag = 'output window, operand 0, single buffered']
    %12 = vsyncpa [#allocation3], 0
    %13 = vsyncpa [#allocation6], 0
    %14 = vsyncpa [#allocation9], 0
    %15 = vsyncpa [#allocation4], 0
    // Predicated region
    $region2: #{tpu_custom_call.1} parent=1 // pred_check
      _
    $region3: #{tpu_custom_call.1} parent=1 // pred_check_branch
      %17 = sbr.rel (0) target = $region5
    $region4: #{tpu_custom_call.1} parent=1 // pred_region
      %s19 = ssub.s32 256, 256
      %20 = vsyncadd [#allocation3], %s19
      %s21 = sshll.u32 [#allocation2], 4
      %s22 = int_to_ptr.vmem [resolvable:$true] %s21
      %27 = dma.hbm_to_vmem [thread:$0]  %s0, 256, %s22, [#allocation3], 128, 128, 8
    $region5: #{tpu_custom_call.1} parent=1 // pred_fallthru
      _
    // Predicated region
    $region6: #{tpu_custom_call.1} parent=1 // pred_check
      _
    $region7: #{tpu_custom_call.1} parent=1 // pred_check_branch
      %29 = sbr.rel (0) target = $region9
    $region8: #{tpu_custom_call.1} parent=1 // pred_region
      %s31 = ssub.s32 384, 384
      %32 = vsyncadd [#allocation6], %s31
      %s33 = sshll.u32 [#allocation5], 4
      %s34 = int_to_ptr.vmem [resolvable:$true] %s33
      %39 = dma.hbm_to_vmem [thread:$0]  %s1, 384, %s34, [#allocation6], 128, 128, 8
    $region9: #{tpu_custom_call.1} parent=1 // pred_fallthru
      _
    // Predicated region
    $region10: #{tpu_custom_call.1} parent=1 // pred_check
      _
    $region11: #{tpu_custom_call.1} parent=1 // pred_check_branch
      %41 = sbr.rel (0) target = $region13
    $region12: #{tpu_custom_call.1} parent=1 // pred_region
      _
    $region13: #{tpu_custom_call.1} parent=1 // pred_fallthru
      _
    // Predicated region
    $region14: #{tpu_custom_call.1} parent=1 // pred_check
      _
    $region15: #{tpu_custom_call.1} parent=1 // pred_check_branch
      %43 = sbr.rel (0) target = $region17
    $region16: #{tpu_custom_call.1} parent=1 // pred_region
      %s45 = ssub.s32 1024, 1024
      %46 = vsyncadd [#allocation6], %s45
      %s47 = sshll.u32 [#allocation7], 4
      %s48 = int_to_ptr.vmem [resolvable:$true] %s47
      %53 = dma.hbm_to_vmem [thread:$0]  %s3, 1024, %s48, [#allocation6], 128, 128, 8
    $region17: #{tpu_custom_call.1} parent=1 // pred_fallthru
      _
    // Predicated region
    $region18: #{tpu_custom_call.1} parent=1 // pred_check
      _
    $region19: #{tpu_custom_call.1} parent=1 // pred_check_branch
      %55 = sbr.rel (0) target = $region21
    $region20: #{tpu_custom_call.1} parent=1 // pred_region
      _
    $region21: #{tpu_custom_call.1} parent=1 // pred_fallthru
      _
    // Predicated region
    $region22: #{tpu_custom_call.1} parent=1 // pred_check
      _
    $region23: #{tpu_custom_call.1} parent=1 // pred_check_branch
      %57 = sbr.rel (0) target = $region25
    $region24: #{tpu_custom_call.1} parent=1 // pred_region
      %s59 = ssub.s32 1024, 1024
      %60 = vsyncadd [#allocation9], %s59
      %s61 = sshll.u32 [#allocation8], 4
      %s62 = int_to_ptr.vmem [resolvable:$true] %s61
      %67 = dma.hbm_to_vmem [thread:$0]  %s5, 1024, %s62, [#allocation9], 128, 128, 8
    $region25: #{tpu_custom_call.1} parent=1 // pred_fallthru
      _
    // Predicated region
    $region26: #{tpu_custom_call.1} parent=1 // pred_check
      _
    $region27: #{tpu_custom_call.1} parent=1 // pred_check_branch
      %69 = sbr.rel (0) target = $region29
    $region28: #{tpu_custom_call.1} parent=1 // pred_region
      _
    $region29: #{tpu_custom_call.1} parent=1 // pred_fallthru
      _
    // Predicated region
    $region30: #{tpu_custom_call.1} parent=1 // pred_check
      _
    $region31: #{tpu_custom_call.1} parent=1 // pred_check_branch
      %71 = sbr.rel (0) target = $region33
    $region32: #{tpu_custom_call.1} parent=1 // pred_region
      %72 = dma.done [#allocation3], 256
    $region33: #{tpu_custom_call.1} parent=1 // pred_fallthru
      _
    // Predicated region
    $region34: #{tpu_custom_call.1} parent=1 // pred_check
      _
    $region35: #{tpu_custom_call.1} parent=1 // pred_check_branch
      %74 = sbr.rel (0) target = $region37
    $region36: #{tpu_custom_call.1} parent=1 // pred_region
      %75 = dma.done [#allocation6], 384
    $region37: #{tpu_custom_call.1} parent=1 // pred_fallthru
      _
    // Predicated region
    $region38: #{tpu_custom_call.1} parent=1 // pred_check
      _
    $region39: #{tpu_custom_call.1} parent=1 // pred_check_branch
      %77 = sbr.rel (0) target = $region41
    $region40: #{tpu_custom_call.1} parent=1 // pred_region
      %78 = dma.done [#allocation6], 1024
    $region41: #{tpu_custom_call.1} parent=1 // pred_fallthru
      _
    // Predicated region
    $region42: #{tpu_custom_call.1} parent=1 // pred_check
      _
    $region43: #{tpu_custom_call.1} parent=1 // pred_check_branch
      %80 = sbr.rel (0) target = $region45
    $region44: #{tpu_custom_call.1} parent=1 // pred_region
      %81 = dma.done [#allocation9], 1024
    $region45: #{tpu_custom_call.1} parent=1 // pred_fallthru
      _
    %v82 = vld [vmem:[#allocation2] sm:$0xff]
    %v83 = vld [vmem:[#allocation2 + $0x8] sm:$0xff]
    %v84 = vld [vmem:[#allocation5] sm:$0xff]
    %v85 = vld [vmem:[#allocation5 + $0x8] sm:$0xff]
    %v86 = vld [vmem:[#allocation5 + $0x10] sm:$0xff]
    %v87 = vld [vmem:[%s2] sm:$0x1]
    %v89 = vlaneseq
    %v90 = vshrl.u32 %v89, 7
    %v91 = vsub.s32 0, %v90
    %v92 = vrot.slane %v87, %v91
    %vm94 = vcmask 195584
    %v96 = vsel %vm94, %v82, 0
    %v99 = vsel %vm94, %v83, 0
    %101 = vmatprep.subr.mxu0 0.0
    %102 = vmatpush1.msra.mxu0 %v84
    %103 = vmatprep.subr.mxu0 0.0
    %104 = vmatpush1.msra.mxu0 %v85
    %105 = vmatprep.subr.mxu0 0.0
    %106 = vmatpush1.msra.mxu0 %v86
    %107 = vmatprep.subr.mxu0 0.0
    %108 = vmatpush1.msra.mxu0 0.0
    %109 = vmatprep.subr.mxu0 0.0
    %110 = vmatpush1.msra.mxu0 0.0
    %111 = vmatprep.subr.mxu0 0.0
    %112 = vmatpush1.msra.mxu0 0.0
    %113 = vmatprep.subr.mxu0 0.0
    %114 = vmatpush1.msra.mxu0 0.0
    %115 = vmatprep.subr.mxu0 0.0
    %116 = vmatpush1.msra.mxu0 0.0
    %117 = vmatprep.subr.mxu0 0.0
    %118 = vmatpush1.msra.mxu0 0.0
    %119 = vmatprep.subr.mxu0 0.0
    %120 = vmatpush1.msra.mxu0 0.0
    %121 = vmatprep.subr.mxu0 0.0
    %122 = vmatpush1.msra.mxu0 0.0
    %123 = vmatprep.subr.mxu0 0.0
    %124 = vmatpush1.msra.mxu0 0.0
    %125 = vmatprep.subr.mxu0 0.0
    %126 = vmatpush1.msra.mxu0 0.0
    %127 = vmatprep.subr.mxu0 0.0
    %128 = vmatpush1.msra.mxu0 0.0
    %129 = vmatprep.subr.mxu0 0.0
    %130 = vmatpush1.msra.mxu0 0.0
    %131 = vmatprep.subr.mxu0 0.0
    %132 = vmatpush1.msra.mxu0 0.0
    %133 = vmatprep.subr.mxu0 0.0
    %134 = vmatpush1.msra.mxu0 0.0
    %135 = vmatprep.subr.mxu0 0.0
    %136 = vmatpush1.msra.mxu0 0.0
    %137 = vmatprep.subr.mxu0 0.0
    %138 = vmatpush1.msra.mxu0 0.0
    %139 = vmatprep.subr.mxu0 0.0
    %140 = vmatpush1.msra.mxu0 0.0
    %141 = vmatprep.subr.mxu0 0.0
    %142 = vmatpush1.msra.mxu0 0.0
    %143 = vmatprep.subr.mxu0 0.0
    %144 = vmatpush1.msra.mxu0 0.0
    %145 = vmatprep.subr.mxu0 0.0
    %146 = vmatpush1.msra.mxu0 0.0
    %147 = vmatprep.subr.mxu0 0.0
    %148 = vmatpush1.msra.mxu0 0.0
    %149 = vmatprep.subr.mxu0 0.0
    %150 = vmatpush1.msra.mxu0 0.0
    %151 = vmatprep.subr.mxu0 0.0
    %152 = vmatpush1.msra.mxu0 0.0
    %153 = vmatprep.subr.mxu0 0.0
    %154 = vmatpush1.msra.mxu0 0.0
    %155 = vmatprep.subr.mxu0 0.0
    %156 = vmatpush1.msra.mxu0 0.0
    %157 = vmatprep.subr.mxu0 0.0
    %158 = vmatpush1.msra.mxu0 0.0
    %159 = vmatprep.subr.mxu0 0.0
    %160 = vmatpush1.msra.mxu0 0.0
    %161 = vmatprep.subr.mxu0 0.0
    %162 = vmatpush1.msra.mxu0 0.0
    %163 = vmatprep.subr.mxu0 0.0
    %164 = vmatpush1.msra.mxu0 0.0
    %165 = vmatprep.mubr.f32.mxu0 0.0
    %166 = vmatmul.mubr.f32.gmra.mrb[0].mxu0 %v96
    %v167 = vpop.f32.mrb[0].mxu0
    %v168 = vadd.f32 %v92, %v167
    %v169 = vpop.f32.mrb[0].mxu0
    %170 = vmatprep.mubr.f32.mxu0 0.0
    %171 = vmatmul.mubr.f32.gmra.mrb[0].mxu0 %v99
    %v172 = vpop.f32.mrb[0].mxu0
    %v173 = vadd.f32 %v92, %v172
    %v174 = vpop.f32.mrb[0].mxu0
    %175 = vdwg.mxu0
    %v176 = vmax.f32 %v168, 0.0
    %v177 = vmax.f32 %v173, 0.0
    %v178 = vld [vmem:[#allocation7] sm:$0xff]
    %v179 = vld [vmem:[#allocation7 + $0x8] sm:$0xff]
    %v180 = vld [vmem:[#allocation7 + $0x10] sm:$0xff]
    %v181 = vld [vmem:[#allocation7 + $0x18] sm:$0xff]
    %v182 = vld [vmem:[#allocation7 + $0x20] sm:$0xff]
    %v183 = vld [vmem:[#allocation7 + $0x28] sm:$0xff]
    %v184 = vld [vmem:[#allocation7 + $0x30] sm:$0xff]
    %v185 = vld [vmem:[#allocation7 + $0x38] sm:$0xff]
    %v186 = vld [vmem:[%s4] sm:$0x1]
    %v188 = vlaneseq
    %v189 = vshrl.u32 %v188, 7
    %v190 = vsub.s32 0, %v189
    %v191 = vrot.slane %v186, %v190
    %vm193 = vcmask 523264
    %v195 = vsel %vm193, %v176, 0
    %v198 = vsel %vm193, %v177, 0
    %200 = vmatprep.subr.mxu0 0.0
    %201 = vmatpush1.msra.mxu0 %v178
    %202 = vmatprep.subr.mxu0 0.0
    %203 = vmatpush1.msra.mxu0 %v179
    %204 = vmatprep.subr.mxu0 0.0
    %205 = vmatpush1.msra.mxu0 %v180
    %206 = vmatprep.subr.mxu0 0.0
    %207 = vmatpush1.msra.mxu0 %v181
    %208 = vmatprep.subr.mxu0 0.0
    %209 = vmatpush1.msra.mxu0 %v182
    %210 = vmatprep.subr.mxu0 0.0
    %211 = vmatpush1.msra.mxu0 %v183
    %212 = vmatprep.subr.mxu0 0.0
    %213 = vmatpush1.msra.mxu0 %v184
    %214 = vmatprep.subr.mxu0 0.0
    %215 = vmatpush1.msra.mxu0 %v185
    %216 = vmatprep.subr.mxu0 0.0
    %217 = vmatpush1.msra.mxu0 0.0
    %218 = vmatprep.subr.mxu0 0.0
    %219 = vmatpush1.msra.mxu0 0.0
    %220 = vmatprep.subr.mxu0 0.0
    %221 = vmatpush1.msra.mxu0 0.0
    %222 = vmatprep.subr.mxu0 0.0
    %223 = vmatpush1.msra.mxu0 0.0
    %224 = vmatprep.subr.mxu0 0.0
    %225 = vmatpush1.msra.mxu0 0.0
    %226 = vmatprep.subr.mxu0 0.0
    %227 = vmatpush1.msra.mxu0 0.0
    %228 = vmatprep.subr.mxu0 0.0
    %229 = vmatpush1.msra.mxu0 0.0
    %230 = vmatprep.subr.mxu0 0.0
    %231 = vmatpush1.msra.mxu0 0.0
    %232 = vmatprep.subr.mxu0 0.0
    %233 = vmatpush1.msra.mxu0 0.0
    %234 = vmatprep.subr.mxu0 0.0
    %235 = vmatpush1.msra.mxu0 0.0
    %236 = vmatprep.subr.mxu0 0.0
    %237 = vmatpush1.msra.mxu0 0.0
    %238 = vmatprep.subr.mxu0 0.0
    %239 = vmatpush1.msra.mxu0 0.0
    %240 = vmatprep.subr.mxu0 0.0
    %241 = vmatpush1.msra.mxu0 0.0
    %242 = vmatprep.subr.mxu0 0.0
    %243 = vmatpush1.msra.mxu0 0.0
    %244 = vmatprep.subr.mxu0 0.0
    %245 = vmatpush1.msra.mxu0 0.0
    %246 = vmatprep.subr.mxu0 0.0
    %247 = vmatpush1.msra.mxu0 0.0
    %248 = vmatprep.subr.mxu0 0.0
    %249 = vmatpush1.msra.mxu0 0.0
    %250 = vmatprep.subr.mxu0 0.0
    %251 = vmatpush1.msra.mxu0 0.0
    %252 = vmatprep.subr.mxu0 0.0
    %253 = vmatpush1.msra.mxu0 0.0
    %254 = vmatprep.subr.mxu0 0.0
    %255 = vmatpush1.msra.mxu0 0.0
    %256 = vmatprep.subr.mxu0 0.0
    %257 = vmatpush1.msra.mxu0 0.0
    %258 = vmatprep.subr.mxu0 0.0
    %259 = vmatpush1.msra.mxu0 0.0
    %260 = vmatprep.subr.mxu0 0.0
    %261 = vmatpush1.msra.mxu0 0.0
    %262 = vmatprep.subr.mxu0 0.0
    %263 = vmatpush1.msra.mxu0 0.0
    %264 = vmatprep.mubr.f32.mxu0 0.0
    %265 = vmatmul.mubr.f32.gmra.mrb[0].mxu0 %v195
    %v266 = vpop.f32.mrb[0].mxu0
    %v267 = vadd.f32 %v191, %v266
    %v268 = vpop.f32.mrb[0].mxu0
    %269 = vmatprep.mubr.f32.mxu0 0.0
    %270 = vmatmul.mubr.f32.gmra.mrb[0].mxu0 %v198
    %v271 = vpop.f32.mrb[0].mxu0
    %v272 = vadd.f32 %v191, %v271
    %v273 = vpop.f32.mrb[0].mxu0
    %274 = vdwg.mxu0
    %v275 = vmax.f32 %v267, 0.0
    %v276 = vmax.f32 %v272, 0.0
    %v277 = vld [vmem:[#allocation8] sm:$0xff]
    %v278 = vld [vmem:[#allocation8 + $0x8] sm:$0xff]
    %v279 = vld [vmem:[#allocation8 + $0x10] sm:$0xff]
    %v280 = vld [vmem:[#allocation8 + $0x18] sm:$0xff]
    %v281 = vld [vmem:[#allocation8 + $0x20] sm:$0xff]
    %v282 = vld [vmem:[#allocation8 + $0x28] sm:$0xff]
    %v283 = vld [vmem:[#allocation8 + $0x30] sm:$0xff]
    %v284 = vld [vmem:[#allocation8 + $0x38] sm:$0xff]
    %v285 = vld [vmem:[%s6] sm:$0x1]
    %v287 = vlaneseq
    %v288 = vshrl.u32 %v287, 7
    %v289 = vsub.s32 0, %v288
    %v290 = vrot.slane %v285, %v289
    %v293 = vsel %vm193, %v275, 0
    %v296 = vsel %vm193, %v276, 0
    %298 = vmatprep.subr.mxu0 0.0
    %299 = vmatpush1.msra.mxu0 %v277
    %300 = vmatprep.subr.mxu0 0.0
    %301 = vmatpush1.msra.mxu0 %v278
    %302 = vmatprep.subr.mxu0 0.0
    %303 = vmatpush1.msra.mxu0 %v279
    %304 = vmatprep.subr.mxu0 0.0
    %305 = vmatpush1.msra.mxu0 %v280
    %306 = vmatprep.subr.mxu0 0.0
    %307 = vmatpush1.msra.mxu0 %v281
    %308 = vmatprep.subr.mxu0 0.0
    %309 = vmatpush1.msra.mxu0 %v282
    %310 = vmatprep.subr.mxu0 0.0
    %311 = vmatpush1.msra.mxu0 %v283
    %312 = vmatprep.subr.mxu0 0.0
    %313 = vmatpush1.msra.mxu0 %v284
    %314 = vmatprep.subr.mxu0 0.0
    %315 = vmatpush1.msra.mxu0 0.0
    %316 = vmatprep.subr.mxu0 0.0
    %317 = vmatpush1.msra.mxu0 0.0
    %318 = vmatprep.subr.mxu0 0.0
    %319 = vmatpush1.msra.mxu0 0.0
    %320 = vmatprep.subr.mxu0 0.0
    %321 = vmatpush1.msra.mxu0 0.0
    %322 = vmatprep.subr.mxu0 0.0
    %323 = vmatpush1.msra.mxu0 0.0
    %324 = vmatprep.subr.mxu0 0.0
    %325 = vmatpush1.msra.mxu0 0.0
    %326 = vmatprep.subr.mxu0 0.0
    %327 = vmatpush1.msra.mxu0 0.0
    %328 = vmatprep.subr.mxu0 0.0
    %329 = vmatpush1.msra.mxu0 0.0
    %330 = vmatprep.subr.mxu0 0.0
    %331 = vmatpush1.msra.mxu0 0.0
    %332 = vmatprep.subr.mxu0 0.0
    %333 = vmatpush1.msra.mxu0 0.0
    %334 = vmatprep.subr.mxu0 0.0
    %335 = vmatpush1.msra.mxu0 0.0
    %336 = vmatprep.subr.mxu0 0.0
    %337 = vmatpush1.msra.mxu0 0.0
    %338 = vmatprep.subr.mxu0 0.0
    %339 = vmatpush1.msra.mxu0 0.0
    %340 = vmatprep.subr.mxu0 0.0
    %341 = vmatpush1.msra.mxu0 0.0
    %342 = vmatprep.subr.mxu0 0.0
    %343 = vmatpush1.msra.mxu0 0.0
    %344 = vmatprep.subr.mxu0 0.0
    %345 = vmatpush1.msra.mxu0 0.0
    %346 = vmatprep.subr.mxu0 0.0
    %347 = vmatpush1.msra.mxu0 0.0
    %348 = vmatprep.subr.mxu0 0.0
    %349 = vmatpush1.msra.mxu0 0.0
    %350 = vmatprep.subr.mxu0 0.0
    %351 = vmatpush1.msra.mxu0 0.0
    %352 = vmatprep.subr.mxu0 0.0
    %353 = vmatpush1.msra.mxu0 0.0
    %354 = vmatprep.subr.mxu0 0.0
    %355 = vmatpush1.msra.mxu0 0.0
    %356 = vmatprep.subr.mxu0 0.0
    %357 = vmatpush1.msra.mxu0 0.0
    %358 = vmatprep.subr.mxu0 0.0
    %359 = vmatpush1.msra.mxu0 0.0
    %360 = vmatprep.subr.mxu0 0.0
    %361 = vmatpush1.msra.mxu0 0.0
    %362 = vmatprep.mubr.f32.mxu0 0.0
    %363 = vmatmul.mubr.f32.gmra.mrb[0].mxu0 %v293
    %v364 = vpop.f32.mrb[0].mxu0
    %v365 = vadd.f32 %v290, %v364
    %v366 = vpop.f32.mrb[0].mxu0
    %367 = vmatprep.mubr.f32.mxu0 0.0
    %368 = vmatmul.mubr.f32.gmra.mrb[0].mxu0 %v296
    %v369 = vpop.f32.mrb[0].mxu0
    %v370 = vadd.f32 %v290, %v369
    %v371 = vpop.f32.mrb[0].mxu0
    %372 = vdwg.mxu0
    %373 = vst [vmem:[#allocation10] sm:$0xff] %v365
    %374 = vst [vmem:[#allocation10 + $0x8] sm:$0xff] %v370
    // Predicated region
    $region46: #{tpu_custom_call.1} parent=1 // pred_check
      _
    $region47: #{tpu_custom_call.1} parent=1 // pred_check_branch
      %376 = sbr.rel (0) target = $region49
    $region48: #{tpu_custom_call.1} parent=1 // pred_region
      %s378 = ssub.s32 256, 256
      %379 = vsyncadd [#allocation4], %s378
      %s380 = sshll.u32 [#allocation10], 4
      %s381 = int_to_ptr.vmem [resolvable:$true] %s380
      %386 = dma.vmem_to_hbm [thread:$0]  %s381, 256, %s7, [#allocation4], 128, 128, 8
    $region49: #{tpu_custom_call.1} parent=1 // pred_fallthru
      _
    // Predicated region
    $region50: #{tpu_custom_call.1} parent=1 // pred_check
      _
    $region51: #{tpu_custom_call.1} parent=1 // pred_check_branch
      %388 = sbr.rel (0) target = $region53
    $region52: #{tpu_custom_call.1} parent=1 // pred_region
      %389 = dma.done [#allocation4], 256
    $region53: #{tpu_custom_call.1} parent=1 // pred_fallthru
      _
    %390 = vsyncpa [#allocation3], 1
    %391 = vsyncpa [#allocation6], 1
    %392 = vsyncpa [#allocation9], 1
    %393 = vsyncpa [#allocation4], 1

</llo_original>
